<compile_context>
chip_gen: v7x
topology: tpu7x:2x2x1
jax: 0.10.0
libtpu: 0.0.40
codegen_flags: <defaults>
</compile_context>

<pallas_src>
import jax
import jax.numpy as jnp
from jax import lax
from jax.experimental import pallas as pl
from jax.experimental.pallas import tpu as pltpu

LANES = 128


def _round_up(x, m):
    return (x + m - 1) // m * m


def actor_kernel(belief_ref, alert_ref, emb_ref,
                 w1_ref, b1_ref,
                 w2a_ref, w2b_ref, b2_ref,
                 w3_ref, b3_ref,
                 w4_ref, b4_ref,
                 out_ref):
    belief = belief_ref[...]                      # [TB, D]  f32
    alert = alert_ref[...]                        # [TB, 1]  i32
    TB = belief.shape[0]
    V = emb_ref.shape[0]                          # vocab = 2**alert_size * 2

    # fc1(belief): bf16 operands, f32 accumulate.
    h1 = jnp.dot(belief.astype(jnp.bfloat16), w1_ref[...],
                 preferred_element_type=jnp.float32) + b1_ref[...]

    # embedding(alert) as a gather-free one-hot matmul on the MXU.
    iota = lax.broadcasted_iota(jnp.int32, (TB, V), 1)
    onehot = (iota == alert).astype(jnp.bfloat16)
    emb = jnp.dot(onehot, emb_ref[...], preferred_element_type=jnp.float32)

    # relu(concat([fc1, emb], -1)) @ w2 + b2
    #   == relu(fc1) @ w2_top + relu(emb) @ w2_bot + b2   (avoids lane concat)
    a1 = jnp.maximum(h1, 0.0).astype(jnp.bfloat16)
    a2 = jnp.maximum(emb, 0.0).astype(jnp.bfloat16)
    h2 = (jnp.dot(a1, w2a_ref[...], preferred_element_type=jnp.float32)
          + jnp.dot(a2, w2b_ref[...], preferred_element_type=jnp.float32)
          + b2_ref[...])
    a3 = jnp.maximum(h2, 0.0).astype(jnp.bfloat16)

    # fc3 + relu
    h3 = jnp.dot(a3, w3_ref[...], preferred_element_type=jnp.float32) + b3_ref[...]
    a4 = jnp.maximum(h3, 0.0).astype(jnp.bfloat16)

    # fc4 (padded to 128 lanes; pad columns carry bias -1e9 so they softmax
    # to exactly 0) + row softmax with EUP approx reciprocal.
    logits = jnp.dot(a4, w4_ref[...], preferred_element_type=jnp.float32) + b4_ref[...]
    m = jnp.max(logits, axis=-1, keepdims=True)
    e = jnp.exp(logits - m)
    s = jnp.sum(e, axis=-1, keepdims=True)
    out_ref[...] = e * pl.reciprocal(s, approx=True)

    # TODO(synk): `binary(alert, alert_size)` / `bin_val` in the PyTorch
    # forward is dead code (computed but never used in the output); omitted.


def prepare_params(p):
    """Kernel-ready params: bf16 matmul weights, f32 biases, pre-split w2,
    fc4 padded to a lane-dense 128-wide output."""
    H = p["w1"].shape[1]
    A = p["w4"].shape[1]
    a_pad = _round_up(max(A, LANES), LANES)
    w4 = jnp.zeros((2 * H, a_pad), jnp.float32).at[:, :A].set(p["w4"])
    b4 = jnp.full((1, a_pad), -1e9, jnp.float32).at[:, :A].set(p["b4"])
    return {
        "emb": p["emb"].astype(jnp.bfloat16),
        "w1": p["w1"].astype(jnp.bfloat16),
        "b1": p["b1"].astype(jnp.float32),
        "w2a": p["w2"][:H, :].astype(jnp.bfloat16),   # rows multiplying fc1 path
        "w2b": p["w2"][H:, :].astype(jnp.bfloat16),   # rows multiplying emb path
        "b2": p["b2"].astype(jnp.float32),
        "w3": p["w3"].astype(jnp.bfloat16),
        "b3": p["b3"].astype(jnp.float32),
        "w4": w4.astype(jnp.bfloat16),
        "b4": b4,
        "num_actions": A,
    }


def actor_forward(x, kp, *, tb=256):
    """x: [B, input_size] f32 (last column holds integer-valued alert ids)."""
    B = x.shape[0]
    D = x.shape[1] - 1
    A = kp["num_actions"]
    a_pad = kp["w4"].shape[1]

    belief = x[:, :-1].astype(jnp.float32)                # [B, D]
    alert = x[:, -1].astype(jnp.int32).reshape(-1, 1)     # [B, 1]

    # Batch tile: multiple of 8 sublanes, capped at `tb`; per-tile VMEM
    # footprint (dominated by the [TB, V] one-hot) stays far under every
    # generation's scoped-VMEM default at tb<=256, so no vmem_limit needed.
    TB = min(tb, _round_up(B, 8))
    B_pad = _round_up(B, TB)
    if B_pad != B:
        belief = jnp.pad(belief, ((0, B_pad - B), (0, 0)))
        alert = jnp.pad(alert, ((0, B_pad - B), (0, 0)))   # pad id 0 is valid

    grid = (B_pad // TB,)
    batched = lambda shape: pl.BlockSpec(shape, lambda i: (i, 0))
    resident = lambda a: pl.BlockSpec(a.shape, lambda i: (0, 0))

    out = pl.pallas_call(
        actor_kernel,
        out_shape=jax.ShapeDtypeStruct((B_pad, a_pad), jnp.float32),
        grid=grid,
        in_specs=[
            batched((TB, D)),            # belief streams per batch tile
            batched((TB, 1)),            # alert ids stream per batch tile
            resident(kp["emb"]),         # weights/biases stay VMEM-resident
            resident(kp["w1"]), resident(kp["b1"]),
            resident(kp["w2a"]), resident(kp["w2b"]), resident(kp["b2"]),
            resident(kp["w3"]), resident(kp["b3"]),
            resident(kp["w4"]), resident(kp["b4"]),
        ],
        out_specs=batched((TB, a_pad)),
        compiler_params=pltpu.CompilerParams(
            # batch axis is independent -> megacore-shardable on v7x
            dimension_semantics=("parallel",),
        ),
    )(belief, alert, kp["emb"], kp["w1"], kp["b1"],
      kp["w2a"], kp["w2b"], kp["b2"], kp["w3"], kp["b3"],
      kp["w4"], kp["b4"])
    return out[:B, :A]


def ref_forward(x, p):
    """Pure-JAX f32 reference matching the PyTorch forward."""
    belief = x[:, :-1]
    alert = x[:, -1].astype(jnp.int32)
    h1 = belief @ p["w1"] + p["b1"][0]
    emb = p["emb"][alert]
    out = jax.nn.relu(jnp.concatenate([h1, emb], axis=-1))
    out = jax.nn.relu(out @ p["w2"] + p["b2"][0])
    out = jax.nn.relu(out @ p["w3"] + p["b3"][0])
    return jax.nn.softmax(out @ p["w4"] + p["b4"][0], axis=-1)


def make_params(key, input_size, alert_size, hidden_size):
    D = input_size - 1
    H = hidden_size
    V = 2 ** alert_size * 2
    A = alert_size
    ks = jax.random.split(key, 9)
    s = 0.1
    return {
        "emb": jax.random.normal(ks[0], (V, H), jnp.float32) * s,
        "w1": jax.random.normal(ks[1], (D, H), jnp.float32) * s,
        "b1": jax.random.normal(ks[2], (1, H), jnp.float32) * s,
        "w2": jax.random.normal(ks[3], (2 * H, 2 * H), jnp.float32) * s,
        "b2": jax.random.normal(ks[4], (1, 2 * H), jnp.float32) * s,
        "w3": jax.random.normal(ks[5], (2 * H, 2 * H), jnp.float32) * s,
        "b3": jax.random.normal(ks[6], (1, 2 * H), jnp.float32) * s,
        "w4": jax.random.normal(ks[7], (2 * H, A), jnp.float32) * s,
        "b4": jax.random.normal(ks[8], (1, A), jnp.float32) * s,
    }


if __name__ == "__main__":
    input_size, alert_size, hidden_size = 17, 8, 32
    batch = 8

    key = jax.random.PRNGKey(0)
    key_p, key_b, key_a = jax.random.split(key, 3)
    params = make_params(key_p, input_size, alert_size, hidden_size)
    kparams = prepare_params(params)

    belief = jax.random.normal(key_b, (batch, input_size - 1), jnp.float32)
    alert = jax.random.randint(key_a, (batch,), 0, 2 ** alert_size * 2, jnp.int32)
    x = jnp.concatenate([belief, alert.astype(jnp.float32)[:, None]], axis=1)

    out = actor_forward(x, kparams)
    out = jax.block_until_ready(out)

    ref = ref_forward(x, params)
    assert out.shape == (batch, alert_size)
    # bf16 matmul operands + approx reciprocal shift results slightly vs f32.
    assert jnp.allclose(out, ref, atol=1e-2, rtol=5e-2), (out, ref)
    assert jnp.allclose(jnp.sum(out, axis=-1), 1.0, atol=5e-3)

    print("KERNEL_OK")
</pallas_src>

<mosaic_0001>
module attributes {stable_mosaic.version = 11 : i64} {
  func.func @actor_kernel(%arg0: i32, %arg1: memref<8x16xf32, #tpu.memory_space<vmem>>, %arg2: memref<8x1xi32, #tpu.memory_space<vmem>>, %arg3: memref<512x32xbf16, #tpu.memory_space<vmem>>, %arg4: memref<16x32xbf16, #tpu.memory_space<vmem>>, %arg5: memref<1x32xf32, #tpu.memory_space<vmem>>, %arg6: memref<32x64xbf16, #tpu.memory_space<vmem>>, %arg7: memref<32x64xbf16, #tpu.memory_space<vmem>>, %arg8: memref<1x64xf32, #tpu.memory_space<vmem>>, %arg9: memref<64x64xbf16, #tpu.memory_space<vmem>>, %arg10: memref<1x64xf32, #tpu.memory_space<vmem>>, %arg11: memref<64x128xbf16, #tpu.memory_space<vmem>>, %arg12: memref<1x128xf32, #tpu.memory_space<vmem>>, %arg13: memref<8x128xf32, #tpu.memory_space<vmem>>) attributes {dimension_semantics = [#tpu.dimension_semantics<parallel>], iteration_bounds = array<i64: 1>, scalar_prefetch = 0 : i64, scratch_operands = 0 : i64, tpu.core_type = #tpu.core_type<tc>, window_params = [{transform_indices = @transform_0, window_bounds = array<i64: 8, 16>}, {transform_indices = @transform_1, window_bounds = array<i64: 8, 1>}, {pipeline_mode = #tpu.pipeline_mode<synchronous>, transform_indices = @transform_2, window_bounds = array<i64: 512, 32>}, {pipeline_mode = #tpu.pipeline_mode<synchronous>, transform_indices = @transform_3, window_bounds = array<i64: 16, 32>}, {pipeline_mode = #tpu.pipeline_mode<synchronous>, transform_indices = @transform_4, window_bounds = array<i64: 1, 32>}, {pipeline_mode = #tpu.pipeline_mode<synchronous>, transform_indices = @transform_5, window_bounds = array<i64: 32, 64>}, {pipeline_mode = #tpu.pipeline_mode<synchronous>, transform_indices = @transform_6, window_bounds = array<i64: 32, 64>}, {pipeline_mode = #tpu.pipeline_mode<synchronous>, transform_indices = @transform_7, window_bounds = array<i64: 1, 64>}, {pipeline_mode = #tpu.pipeline_mode<synchronous>, transform_indices = @transform_8, window_bounds = array<i64: 64, 64>}, {pipeline_mode = #tpu.pipeline_mode<synchronous>, transform_indices = @transform_9, window_bounds = array<i64: 1, 64>}, {pipeline_mode = #tpu.pipeline_mode<synchronous>, transform_indices = @transform_10, window_bounds = array<i64: 64, 128>}, {pipeline_mode = #tpu.pipeline_mode<synchronous>, transform_indices = @transform_11, window_bounds = array<i64: 1, 128>}, {transform_indices = @transform_12, window_bounds = array<i64: 8, 128>}]} {
    %c0 = arith.constant 0 : index
    %c0_0 = arith.constant 0 : index
    %0 = vector.load %arg1[%c0, %c0_0] : memref<8x16xf32, #tpu.memory_space<vmem>>, vector<8x16xf32>
    %c0_1 = arith.constant 0 : index
    %c0_2 = arith.constant 0 : index
    %1 = vector.load %arg2[%c0_1, %c0_2] : memref<8x1xi32, #tpu.memory_space<vmem>>, vector<8x1xi32>
    %2 = arith.truncf %0 : vector<8x16xf32> to vector<8x16xbf16>
    %c0_3 = arith.constant 0 : index
    %c0_4 = arith.constant 0 : index
    %3 = vector.load %arg4[%c0_3, %c0_4] : memref<16x32xbf16, #tpu.memory_space<vmem>>, vector<16x32xbf16>
    %cst = arith.constant dense<0.000000e+00> : vector<8x32xf32>
    %4 = tpu.matmul %2, %3, %cst {dimension_numbers = #tpu.dot_dimension_numbers<[1], [0], [0], [1], [0, 0, 1, 1], [], []>} : vector<8x16xbf16>, vector<16x32xbf16>, vector<8x32xf32> -> vector<8x32xf32>
    %c0_5 = arith.constant 0 : index
    %c0_6 = arith.constant 0 : index
    %5 = vector.load %arg5[%c0_5, %c0_6] : memref<1x32xf32, #tpu.memory_space<vmem>>, vector<1x32xf32>
    %6 = vector.broadcast %5 : vector<1x32xf32> to vector<8x32xf32>
    %7 = arith.addf %4, %6 : vector<8x32xf32>
    %8 = tpu.iota {dimensions = array<i32: 1>} : vector<8x512xi32>
    %9 = vector.broadcast %1 : vector<8x1xi32> to vector<8x512xi32>
    %10 = arith.cmpi eq, %8, %9 : vector<8x512xi32>
    %11 = arith.extui %10 : vector<8x512xi1> to vector<8x512xi32>
    %12 = arith.sitofp %11 : vector<8x512xi32> to vector<8x512xf32>
    %13 = arith.truncf %12 : vector<8x512xf32> to vector<8x512xbf16>
    %c0_7 = arith.constant 0 : index
    %c0_8 = arith.constant 0 : index
    %14 = vector.load %arg3[%c0_7, %c0_8] : memref<512x32xbf16, #tpu.memory_space<vmem>>, vector<512x32xbf16>
    %cst_9 = arith.constant dense<0.000000e+00> : vector<8x32xf32>
    %15 = tpu.matmul %13, %14, %cst_9 {dimension_numbers = #tpu.dot_dimension_numbers<[1], [0], [0], [1], [0, 0, 1, 1], [], []>} : vector<8x512xbf16>, vector<512x32xbf16>, vector<8x32xf32> -> vector<8x32xf32>
    %cst_10 = arith.constant 0.000000e+00 : f32
    %16 = vector.broadcast %cst_10 : f32 to vector<8x32xf32>
    %17 = arith.maximumf %7, %16 : vector<8x32xf32>
    %18 = arith.truncf %17 : vector<8x32xf32> to vector<8x32xbf16>
    %cst_11 = arith.constant 0.000000e+00 : f32
    %19 = vector.broadcast %cst_11 : f32 to vector<8x32xf32>
    %20 = arith.maximumf %15, %19 : vector<8x32xf32>
    %21 = arith.truncf %20 : vector<8x32xf32> to vector<8x32xbf16>
    %c0_12 = arith.constant 0 : index
    %c0_13 = arith.constant 0 : index
    %22 = vector.load %arg6[%c0_12, %c0_13] : memref<32x64xbf16, #tpu.memory_space<vmem>>, vector<32x64xbf16>
    %cst_14 = arith.constant dense<0.000000e+00> : vector<8x64xf32>
    %23 = tpu.matmul %18, %22, %cst_14 {dimension_numbers = #tpu.dot_dimension_numbers<[1], [0], [0], [1], [0, 0, 1, 1], [], []>} : vector<8x32xbf16>, vector<32x64xbf16>, vector<8x64xf32> -> vector<8x64xf32>
    %c0_15 = arith.constant 0 : index
    %c0_16 = arith.constant 0 : index
    %24 = vector.load %arg7[%c0_15, %c0_16] : memref<32x64xbf16, #tpu.memory_space<vmem>>, vector<32x64xbf16>
    %cst_17 = arith.constant dense<0.000000e+00> : vector<8x64xf32>
    %25 = tpu.matmul %21, %24, %cst_17 {dimension_numbers = #tpu.dot_dimension_numbers<[1], [0], [0], [1], [0, 0, 1, 1], [], []>} : vector<8x32xbf16>, vector<32x64xbf16>, vector<8x64xf32> -> vector<8x64xf32>
    %26 = arith.addf %23, %25 : vector<8x64xf32>
    %c0_18 = arith.constant 0 : index
    %c0_19 = arith.constant 0 : index
    %27 = vector.load %arg8[%c0_18, %c0_19] : memref<1x64xf32, #tpu.memory_space<vmem>>, vector<1x64xf32>
    %28 = vector.broadcast %27 : vector<1x64xf32> to vector<8x64xf32>
    %29 = arith.addf %26, %28 : vector<8x64xf32>
    %cst_20 = arith.constant 0.000000e+00 : f32
    %30 = vector.broadcast %cst_20 : f32 to vector<8x64xf32>
    %31 = arith.maximumf %29, %30 : vector<8x64xf32>
    %32 = arith.truncf %31 : vector<8x64xf32> to vector<8x64xbf16>
    %c0_21 = arith.constant 0 : index
    %c0_22 = arith.constant 0 : index
    %33 = vector.load %arg9[%c0_21, %c0_22] : memref<64x64xbf16, #tpu.memory_space<vmem>>, vector<64x64xbf16>
    %cst_23 = arith.constant dense<0.000000e+00> : vector<8x64xf32>
    %34 = tpu.matmul %32, %33, %cst_23 {dimension_numbers = #tpu.dot_dimension_numbers<[1], [0], [0], [1], [0, 0, 1, 1], [], []>} : vector<8x64xbf16>, vector<64x64xbf16>, vector<8x64xf32> -> vector<8x64xf32>
    %c0_24 = arith.constant 0 : index
    %c0_25 = arith.constant 0 : index
    %35 = vector.load %arg10[%c0_24, %c0_25] : memref<1x64xf32, #tpu.memory_space<vmem>>, vector<1x64xf32>
    %36 = vector.broadcast %35 : vector<1x64xf32> to vector<8x64xf32>
    %37 = arith.addf %34, %36 : vector<8x64xf32>
    %cst_26 = arith.constant 0.000000e+00 : f32
    %38 = vector.broadcast %cst_26 : f32 to vector<8x64xf32>
    %39 = arith.maximumf %37, %38 : vector<8x64xf32>
    %40 = arith.truncf %39 : vector<8x64xf32> to vector<8x64xbf16>
    %c0_27 = arith.constant 0 : index
    %c0_28 = arith.constant 0 : index
    %41 = vector.load %arg11[%c0_27, %c0_28] : memref<64x128xbf16, #tpu.memory_space<vmem>>, vector<64x128xbf16>
    %cst_29 = arith.constant dense<0.000000e+00> : vector<8x128xf32>
    %42 = tpu.matmul %40, %41, %cst_29 {dimension_numbers = #tpu.dot_dimension_numbers<[1], [0], [0], [1], [0, 0, 1, 1], [], []>} : vector<8x64xbf16>, vector<64x128xbf16>, vector<8x128xf32> -> vector<8x128xf32>
    %c0_30 = arith.constant 0 : index
    %c0_31 = arith.constant 0 : index
    %43 = vector.load %arg12[%c0_30, %c0_31] : memref<1x128xf32, #tpu.memory_space<vmem>>, vector<1x128xf32>
    %44 = vector.broadcast %43 : vector<1x128xf32> to vector<8x128xf32>
    %45 = arith.addf %42, %44 : vector<8x128xf32>
    %cst_32 = arith.constant dense<0xFF800000> : vector<8xf32>
    %46 = vector.multi_reduction <maximumf>, %45, %cst_32 [1] : vector<8x128xf32> to vector<8xf32>
    %47 = vector.shape_cast %46 : vector<8xf32> to vector<8x1xf32>
    %48 = vector.broadcast %47 : vector<8x1xf32> to vector<8x128xf32>
    %49 = arith.subf %45, %48 : vector<8x128xf32>
    %50 = math.exp %49 : vector<8x128xf32>
    %cst_33 = arith.constant dense<0.000000e+00> : vector<8xf32>
    %51 = vector.multi_reduction <add>, %50, %cst_33 [1] : vector<8x128xf32> to vector<8xf32>
    %52 = vector.shape_cast %51 : vector<8xf32> to vector<8x1xf32>
    %53 = tpu.reciprocal %52 {approx = true} : vector<8x1xf32> -> vector<8x1xf32>
    %54 = vector.broadcast %53 : vector<8x1xf32> to vector<8x128xf32>
    %55 = arith.mulf %50, %54 : vector<8x128xf32>
    %c0_34 = arith.constant 0 : index
    %c0_35 = arith.constant 0 : index
    %56 = vector.load %arg13[%c0_34, %c0_35] : memref<8x128xf32, #tpu.memory_space<vmem>>, vector<8x128xf32>
    tpu.vector_store %arg13[%c0_34, %c0_35], %55 {strides = array<i32>} : memref<8x128xf32, #tpu.memory_space<vmem>>, vector<8x128xf32>,
    return
  }
  func.func @transform_0(%arg0: i32) -> (i32, i32) {
    %c0_i32 = arith.constant 0 : i32
    %c0_i32_0 = arith.constant 0 : i32
    return %arg0, %c0_i32 : i32, i32
  }
  func.func @transform_1(%arg0: i32) -> (i32, i32) {
    %c0_i32 = arith.constant 0 : i32
    %c0_i32_0 = arith.constant 0 : i32
    return %arg0, %c0_i32 : i32, i32
  }
  func.func @transform_2(%arg0: i32) -> (i32, i32) {
    %c0_i32 = arith.constant 0 : i32
    %c0_i32_0 = arith.constant 0 : i32
    %c0_i32_1 = arith.constant 0 : i32
    return %c0_i32, %c0_i32_0 : i32, i32
  }
  func.func @transform_3(%arg0: i32) -> (i32, i32) {
    %c0_i32 = arith.constant 0 : i32
    %c0_i32_0 = arith.constant 0 : i32
    %c0_i32_1 = arith.constant 0 : i32
    return %c0_i32, %c0_i32_0 : i32, i32
  }
  func.func @transform_4(%arg0: i32) -> (i32, i32) {
    %c0_i32 = arith.constant 0 : i32
    %c0_i32_0 = arith.constant 0 : i32
    %c0_i32_1 = arith.constant 0 : i32
    return %c0_i32, %c0_i32_0 : i32, i32
  }
  func.func @transform_5(%arg0: i32) -> (i32, i32) {
    %c0_i32 = arith.constant 0 : i32
    %c0_i32_0 = arith.constant 0 : i32
    %c0_i32_1 = arith.constant 0 : i32
    return %c0_i32, %c0_i32_0 : i32, i32
  }
  func.func @transform_6(%arg0: i32) -> (i32, i32) {
    %c0_i32 = arith.constant 0 : i32
    %c0_i32_0 = arith.constant 0 : i32
    %c0_i32_1 = arith.constant 0 : i32
    return %c0_i32, %c0_i32_0 : i32, i32
  }
  func.func @transform_7(%arg0: i32) -> (i32, i32) {
    %c0_i32 = arith.constant 0 : i32
    %c0_i32_0 = arith.constant 0 : i32
    %c0_i32_1 = arith.constant 0 : i32
    return %c0_i32, %c0_i32_0 : i32, i32
  }
  func.func @transform_8(%arg0: i32) -> (i32, i32) {
    %c0_i32 = arith.constant 0 : i32
    %c0_i32_0 = arith.constant 0 : i32
    %c0_i32_1 = arith.constant 0 : i32
    return %c0_i32, %c0_i32_0 : i32, i32
  }
  func.func @transform_9(%arg0: i32) -> (i32, i32) {
    %c0_i32 = arith.constant 0 : i32
    %c0_i32_0 = arith.constant 0 : i32
    %c0_i32_1 = arith.constant 0 : i32
    return %c0_i32, %c0_i32_0 : i32, i32
  }
  func.func @transform_10(%arg0: i32) -> (i32, i32) {
    %c0_i32 = arith.constant 0 : i32
    %c0_i32_0 = arith.constant 0 : i32
    %c0_i32_1 = arith.constant 0 : i32
    return %c0_i32, %c0_i32_0 : i32, i32
  }
  func.func @transform_11(%arg0: i32) -> (i32, i32) {
    %c0_i32 = arith.constant 0 : i32
    %c0_i32_0 = arith.constant 0 : i32
    %c0_i32_1 = arith.constant 0 : i32
    return %c0_i32, %c0_i32_0 : i32, i32
  }
  func.func @transform_12(%arg0: i32) -> (i32, i32) {
    %c0_i32 = arith.constant 0 : i32
    %c0_i32_0 = arith.constant 0 : i32
    return %arg0, %c0_i32 : i32, i32
  }
}

</mosaic_0001>

<llo_original>
// kernel: tpu_custom_call.1
$region0: #{tpu_custom_call.1}
  #allocation0 [shape = 'u32[]', space=smem, size = 0x4, offset = 0x4, fixed_abs, tag = 'smem constant byte address 0x4 - core index']
  #allocation1 [shape = 'u32[144,128]{1,0:T(1,128)}', space=vmem, size = 0x12000, scoped, tag = 'internal scratch']
  %s0 = inlined_call_operand.vmem [shape: f32[8,16], index: 0, kind: input, shape index: {}]
  %s1 = inlined_call_operand.vmem [shape: s32[8,1], index: 1, kind: input, shape index: {}]
  %s2 = inlined_call_operand.vmem [shape: bf16[512,32], index: 2, kind: input, shape index: {}]
  %s3 = inlined_call_operand.vmem [shape: bf16[16,32], index: 3, kind: input, shape index: {}]
  %s4 = inlined_call_operand.vmem [shape: f32[1,32], index: 4, kind: input, shape index: {}]
  %s5 = inlined_call_operand.vmem [shape: bf16[32,64], index: 5, kind: input, shape index: {}]
  %s6 = inlined_call_operand.vmem [shape: bf16[32,64], index: 6, kind: input, shape index: {}]
  %s7 = inlined_call_operand.vmem [shape: f32[1,64], index: 7, kind: input, shape index: {}]
  %s8 = inlined_call_operand.vmem [shape: bf16[64,64], index: 8, kind: input, shape index: {}]
  %s9 = inlined_call_operand.vmem [shape: f32[1,64], index: 9, kind: input, shape index: {}]
  %s10 = inlined_call_operand.vmem [shape: bf16[64,128], index: 10, kind: input, shape index: {}]
  %s11 = inlined_call_operand.vmem [shape: f32[1,128], index: 11, kind: input, shape index: {}]
  %s12 = inlined_call_operand.hbm [shape: f32[8,128], index: 12, kind: output, shape index: {}]
  %s13 = sld [smem:[#allocation0]]
  $region58: #{tpu_custom_call.1} parent=0
    _
  %s15 = ssub.s32 1, %s13
  %s16 = scalar_select 0, %s15, %s13
  $region1: #{tpu_custom_call.1} parent=0
    #allocation2 [shape = 'u8[4096]{0}', space=vmem, size = 0x1000, scoped, tag = 'output window, operand 0, single buffered']
    #allocation3 [shape = 's32[1]{0}', space=sflag, size = 0x4, scoped, tag = 'scoped memory for tpu_custom_call.1']
    %17 = vsyncpa [#allocation3], 0
    // Predicated region
    $region2: #{tpu_custom_call.1} parent=1 // pred_check
      _
    $region3: #{tpu_custom_call.1} parent=1 // pred_check_branch
      %19 = sbr.rel (0) target = $region5
    $region4: #{tpu_custom_call.1} parent=1 // pred_region
      _
    $region5: #{tpu_custom_call.1} parent=1 // pred_fallthru
      _
    // Predicated region
    $region6: #{tpu_custom_call.1} parent=1 // pred_check
      _
    $region7: #{tpu_custom_call.1} parent=1 // pred_check_branch
      %21 = sbr.rel (0) target = $region9
    $region8: #{tpu_custom_call.1} parent=1 // pred_region
      _
    $region9: #{tpu_custom_call.1} parent=1 // pred_fallthru
      _
    // Predicated region
    $region10: #{tpu_custom_call.1} parent=1 // pred_check
      _
    $region11: #{tpu_custom_call.1} parent=1 // pred_check_branch
      %23 = sbr.rel (0) target = $region13
    $region12: #{tpu_custom_call.1} parent=1 // pred_region
      _
    $region13: #{tpu_custom_call.1} parent=1 // pred_fallthru
      _
    // Predicated region
    $region14: #{tpu_custom_call.1} parent=1 // pred_check
      _
    $region15: #{tpu_custom_call.1} parent=1 // pred_check_branch
      %25 = sbr.rel (0) target = $region17
    $region16: #{tpu_custom_call.1} parent=1 // pred_region
      _
    $region17: #{tpu_custom_call.1} parent=1 // pred_fallthru
      _
    // Predicated region
    $region18: #{tpu_custom_call.1} parent=1 // pred_check
      _
    $region19: #{tpu_custom_call.1} parent=1 // pred_check_branch
      %27 = sbr.rel (0) target = $region21
    $region20: #{tpu_custom_call.1} parent=1 // pred_region
      _
    $region21: #{tpu_custom_call.1} parent=1 // pred_fallthru
      _
    // Predicated region
    $region22: #{tpu_custom_call.1} parent=1 // pred_check
      _
    $region23: #{tpu_custom_call.1} parent=1 // pred_check_branch
      %29 = sbr.rel (0) target = $region25
    $region24: #{tpu_custom_call.1} parent=1 // pred_region
      _
    $region25: #{tpu_custom_call.1} parent=1 // pred_fallthru
      _
    // Predicated region
    $region26: #{tpu_custom_call.1} parent=1 // pred_check
      _
    $region27: #{tpu_custom_call.1} parent=1 // pred_check_branch
      %31 = sbr.rel (0) target = $region29
    $region28: #{tpu_custom_call.1} parent=1 // pred_region
      _
    $region29: #{tpu_custom_call.1} parent=1 // pred_fallthru
      _
    // Predicated region
    $region30: #{tpu_custom_call.1} parent=1 // pred_check
      _
    $region31: #{tpu_custom_call.1} parent=1 // pred_check_branch
      %33 = sbr.rel (0) target = $region33
    $region32: #{tpu_custom_call.1} parent=1 // pred_region
      _
    $region33: #{tpu_custom_call.1} parent=1 // pred_fallthru
      _
    // Predicated region
    $region34: #{tpu_custom_call.1} parent=1 // pred_check
      _
    $region35: #{tpu_custom_call.1} parent=1 // pred_check_branch
      %35 = sbr.rel (0) target = $region37
    $region36: #{tpu_custom_call.1} parent=1 // pred_region
      _
    $region37: #{tpu_custom_call.1} parent=1 // pred_fallthru
      _
    // Predicated region
    $region38: #{tpu_custom_call.1} parent=1 // pred_check
      _
    $region39: #{tpu_custom_call.1} parent=1 // pred_check_branch
      %37 = sbr.rel (0) target = $region41
    $region40: #{tpu_custom_call.1} parent=1 // pred_region
      _
    $region41: #{tpu_custom_call.1} parent=1 // pred_fallthru
      _
    // Predicated region
    $region42: #{tpu_custom_call.1} parent=1 // pred_check
      _
    $region43: #{tpu_custom_call.1} parent=1 // pred_check_branch
      %39 = sbr.rel (0) target = $region45
    $region44: #{tpu_custom_call.1} parent=1 // pred_region
      _
    $region45: #{tpu_custom_call.1} parent=1 // pred_fallthru
      _
    // Predicated region
    $region46: #{tpu_custom_call.1} parent=1 // pred_check
      _
    $region47: #{tpu_custom_call.1} parent=1 // pred_check_branch
      %41 = sbr.rel (0) target = $region49
    $region48: #{tpu_custom_call.1} parent=1 // pred_region
      _
    $region49: #{tpu_custom_call.1} parent=1 // pred_fallthru
      _
    %v43 = vld [vmem:[%s0] sm:$0xff]
    %v44 = vld [vmem:[%s1] sm:$0xff]
    %v45 = vpack.c.bf16 %v43, %v43
    %v46 = vld [vmem:[%s3] sm:$0xf]
    %v47 = vld [vmem:[%s3 + $0x4] sm:$0xf]
    %v48 = vld [vmem:[%s4] sm:$0x1]
    %v50 = vlaneseq
    %v51 = vshrl.u32 %v50, 7
    %v52 = vsub.s32 0, %v51
    %v53 = vrot.slane %v48, %v52
    %v57 = vunpack.c.l.b16 %v46
    %v58 = vunpack.c.l.b16 %v47
    %v59 = vpack.c.b16 %v58, %v57
    %vm61 = vcmask 130048
    %v63 = vsel %vm61, %v45, 0
    %65 = vmatprep.subr.bf16.mxu0 0
    %66 = vmatpush1.bf16.msra.mxu0 %v59
    %67 = vmatprep.subr.bf16.mxu0 0
    %68 = vmatpush1.bf16.msra.mxu0 0
    %69 = vmatprep.subr.bf16.mxu0 0
    %70 = vmatpush1.bf16.msra.mxu0 0
    %71 = vmatprep.subr.bf16.mxu0 0
    %72 = vmatpush1.bf16.msra.mxu0 0
    %73 = vmatprep.subr.bf16.mxu0 0
    %74 = vmatpush1.bf16.msra.mxu0 0
    %75 = vmatprep.subr.bf16.mxu0 0
    %76 = vmatpush1.bf16.msra.mxu0 0
    %77 = vmatprep.subr.bf16.mxu0 0
    %78 = vmatpush1.bf16.msra.mxu0 0
    %79 = vmatprep.subr.bf16.mxu0 0
    %80 = vmatpush1.bf16.msra.mxu0 0
    %81 = vmatprep.subr.bf16.mxu0 0
    %82 = vmatpush1.bf16.msra.mxu0 0
    %83 = vmatprep.subr.bf16.mxu0 0
    %84 = vmatpush1.bf16.msra.mxu0 0
    %85 = vmatprep.subr.bf16.mxu0 0
    %86 = vmatpush1.bf16.msra.mxu0 0
    %87 = vmatprep.subr.bf16.mxu0 0
    %88 = vmatpush1.bf16.msra.mxu0 0
    %89 = vmatprep.subr.bf16.mxu0 0
    %90 = vmatpush1.bf16.msra.mxu0 0
    %91 = vmatprep.subr.bf16.mxu0 0
    %92 = vmatpush1.bf16.msra.mxu0 0
    %93 = vmatprep.subr.bf16.mxu0 0
    %94 = vmatpush1.bf16.msra.mxu0 0
    %95 = vmatprep.subr.bf16.mxu0 0
    %96 = vmatpush1.bf16.msra.mxu0 0
    %97 = vmatprep.mubr.bf16.mxu0 0
    %98 = vmatmul.mubr.bf16.gmra.mrb[0].mxu0 %v63
    %v99 = vpop.f32.mrb[0].mxu0
    %v100 = vadd.f32 %v53, %v99
    %v101 = vpop.f32.mrb[0].mxu0
    %v102 = vpop.f32.mrb[0].mxu0
    %v103 = vpop.f32.mrb[0].mxu0
    %104 = vdwg.mxu0
    %v105 = vlaneseq
    %v106 = vand.u32 %v105, 127
    %v107 = vadd.s32 %v106, 128
    %v108 = vadd.s32 %v106, 256
    %v109 = vadd.s32 %v106, 384
    %110 = vset.pattern.permute.xlu0 0
    %111 = vperm.xlu0 %110, %v44
    %v112 = vpop.permute.xlu0 %111
    %vm113 = vcmp.eq.s32.totalorder %v106, %v112
    %vm114 = vcmp.eq.s32.totalorder %v107, %v112
    %vm115 = vcmp.eq.s32.totalorder %v108, %v112
    %vm116 = vcmp.eq.s32.totalorder %v109, %v112
    %v117 = vsel %vm113, 1, 0
    %v118 = vsel %vm114, 1, 0
    %v119 = vsel %vm115, 1, 0
    %v120 = vsel %vm116, 1, 0
    %v121 = vcvt.s32.f32 %v117
    %v122 = vcvt.s32.f32 %v118
    %v123 = vcvt.s32.f32 %v119
    %v124 = vcvt.s32.f32 %v120
    %v125 = vpack.c.bf16 %v121, %v121
    %v126 = vpack.c.bf16 %v122, %v122
    %v127 = vpack.c.bf16 %v123, %v123
    %v128 = vpack.c.bf16 %v124, %v124
    %v129 = vld [vmem:[%s2] sm:$0xf]
    %v130 = vld [vmem:[%s2 + $0x4] sm:$0xf]
    %v131 = vld [vmem:[%s2 + $0x8] sm:$0xf]
    %v132 = vld [vmem:[%s2 + $0xc] sm:$0xf]
    %v133 = vld [vmem:[%s2 + $0x10] sm:$0xf]
    %v134 = vld [vmem:[%s2 + $0x14] sm:$0xf]
    %v135 = vld [vmem:[%s2 + $0x18] sm:$0xf]
    %v136 = vld [vmem:[%s2 + $0x1c] sm:$0xf]
    %v137 = vld [vmem:[%s2 + $0x20] sm:$0xf]
    %v138 = vld [vmem:[%s2 + $0x24] sm:$0xf]
    %v139 = vld [vmem:[%s2 + $0x28] sm:$0xf]
    %v140 = vld [vmem:[%s2 + $0x2c] sm:$0xf]
    %v141 = vld [vmem:[%s2 + $0x30] sm:$0xf]
    %v142 = vld [vmem:[%s2 + $0x34] sm:$0xf]
    %v143 = vld [vmem:[%s2 + $0x38] sm:$0xf]
    %v144 = vld [vmem:[%s2 + $0x3c] sm:$0xf]
    %v145 = vld [vmem:[%s2 + $0x40] sm:$0xf]
    %v146 = vld [vmem:[%s2 + $0x44] sm:$0xf]
    %v147 = vld [vmem:[%s2 + $0x48] sm:$0xf]
    %v148 = vld [vmem:[%s2 + $0x4c] sm:$0xf]
    %v149 = vld [vmem:[%s2 + $0x50] sm:$0xf]
    %v150 = vld [vmem:[%s2 + $0x54] sm:$0xf]
    %v151 = vld [vmem:[%s2 + $0x58] sm:$0xf]
    %v152 = vld [vmem:[%s2 + $0x5c] sm:$0xf]
    %v153 = vld [vmem:[%s2 + $0x60] sm:$0xf]
    %v154 = vld [vmem:[%s2 + $0x64] sm:$0xf]
    %v155 = vld [vmem:[%s2 + $0x68] sm:$0xf]
    %v156 = vld [vmem:[%s2 + $0x6c] sm:$0xf]
    %v157 = vld [vmem:[%s2 + $0x70] sm:$0xf]
    %v158 = vld [vmem:[%s2 + $0x74] sm:$0xf]
    %v159 = vld [vmem:[%s2 + $0x78] sm:$0xf]
    %v160 = vld [vmem:[%s2 + $0x7c] sm:$0xf]
    %v161 = vld [vmem:[%s2 + $0x80] sm:$0xf]
    %v162 = vld [vmem:[%s2 + $0x84] sm:$0xf]
    %v163 = vld [vmem:[%s2 + $0x88] sm:$0xf]
    %v164 = vld [vmem:[%s2 + $0x8c] sm:$0xf]
    %v165 = vld [vmem:[%s2 + $0x90] sm:$0xf]
    %v166 = vld [vmem:[%s2 + $0x94] sm:$0xf]
    %v167 = vld [vmem:[%s2 + $0x98] sm:$0xf]
    %v168 = vld [vmem:[%s2 + $0x9c] sm:$0xf]
    %v169 = vld [vmem:[%s2 + $0xa0] sm:$0xf]
    %v170 = vld [vmem:[%s2 + $0xa4] sm:$0xf]
    %v171 = vld [vmem:[%s2 + $0xa8] sm:$0xf]
    %v172 = vld [vmem:[%s2 + $0xac] sm:$0xf]
    %v173 = vld [vmem:[%s2 + $0xb0] sm:$0xf]
    %v174 = vld [vmem:[%s2 + $0xb4] sm:$0xf]
    %v175 = vld [vmem:[%s2 + $0xb8] sm:$0xf]
    %v176 = vld [vmem:[%s2 + $0xbc] sm:$0xf]
    %v177 = vld [vmem:[%s2 + $0xc0] sm:$0xf]
    %v178 = vld [vmem:[%s2 + $0xc4] sm:$0xf]
    %v179 = vld [vmem:[%s2 + $0xc8] sm:$0xf]
    %v180 = vld [vmem:[%s2 + $0xcc] sm:$0xf]
    %v181 = vld [vmem:[%s2 + $0xd0] sm:$0xf]
    %v182 = vld [vmem:[%s2 + $0xd4] sm:$0xf]
    %v183 = vld [vmem:[%s2 + $0xd8] sm:$0xf]
    %v184 = vld [vmem:[%s2 + $0xdc] sm:$0xf]
    %v185 = vld [vmem:[%s2 + $0xe0] sm:$0xf]
    %v186 = vld [vmem:[%s2 + $0xe4] sm:$0xf]
    %v187 = vld [vmem:[%s2 + $0xe8] sm:$0xf]
    %v188 = vld [vmem:[%s2 + $0xec] sm:$0xf]
    %v189 = vld [vmem:[%s2 + $0xf0] sm:$0xf]
    %v190 = vld [vmem:[%s2 + $0xf4] sm:$0xf]
    %v191 = vld [vmem:[%s2 + $0xf8] sm:$0xf]
    %v192 = vld [vmem:[%s2 + $0xfc] sm:$0xf]
    %v257 = vunpack.c.l.b16 %v129
    %v258 = vunpack.c.l.b16 %v130
    %v259 = vunpack.c.l.b16 %v131
    %v260 = vunpack.c.l.b16 %v132
    %v261 = vunpack.c.l.b16 %v133
    %v262 = vunpack.c.l.b16 %v134
    %v263 = vunpack.c.l.b16 %v135
    %v264 = vunpack.c.l.b16 %v136
    %v265 = vunpack.c.l.b16 %v137
    %v266 = vunpack.c.l.b16 %v138
    %v267 = vunpack.c.l.b16 %v139
    %v268 = vunpack.c.l.b16 %v140
    %v269 = vunpack.c.l.b16 %v141
    %v270 = vunpack.c.l.b16 %v142
    %v271 = vunpack.c.l.b16 %v143
    %v272 = vunpack.c.l.b16 %v144
    %v273 = vunpack.c.l.b16 %v145
    %v274 = vunpack.c.l.b16 %v146
    %v275 = vunpack.c.l.b16 %v147
    %v276 = vunpack.c.l.b16 %v148
    %v277 = vunpack.c.l.b16 %v149
    %v278 = vunpack.c.l.b16 %v150
    %v279 = vunpack.c.l.b16 %v151
    %v280 = vunpack.c.l.b16 %v152
    %v281 = vunpack.c.l.b16 %v153
    %v282 = vunpack.c.l.b16 %v154
    %v283 = vunpack.c.l.b16 %v155
    %v284 = vunpack.c.l.b16 %v156
    %v285 = vunpack.c.l.b16 %v157
    %v286 = vunpack.c.l.b16 %v158
    %v287 = vunpack.c.l.b16 %v159
    %v288 = vunpack.c.l.b16 %v160
    %v289 = vunpack.c.l.b16 %v161
    %v290 = vunpack.c.l.b16 %v162
    %v291 = vunpack.c.l.b16 %v163
    %v292 = vunpack.c.l.b16 %v164
    %v293 = vunpack.c.l.b16 %v165
    %v294 = vunpack.c.l.b16 %v166
    %v295 = vunpack.c.l.b16 %v167
    %v296 = vunpack.c.l.b16 %v168
    %v297 = vunpack.c.l.b16 %v169
    %v298 = vunpack.c.l.b16 %v170
    %v299 = vunpack.c.l.b16 %v171
    %v300 = vunpack.c.l.b16 %v172
    %v301 = vunpack.c.l.b16 %v173
    %v302 = vunpack.c.l.b16 %v174
    %v303 = vunpack.c.l.b16 %v175
    %v304 = vunpack.c.l.b16 %v176
    %v305 = vunpack.c.l.b16 %v177
    %v306 = vunpack.c.l.b16 %v178
    %v307 = vunpack.c.l.b16 %v179
    %v308 = vunpack.c.l.b16 %v180
    %v309 = vunpack.c.l.b16 %v181
    %v310 = vunpack.c.l.b16 %v182
    %v311 = vunpack.c.l.b16 %v183
    %v312 = vunpack.c.l.b16 %v184
    %v313 = vunpack.c.l.b16 %v185
    %v314 = vunpack.c.l.b16 %v186
    %v315 = vunpack.c.l.b16 %v187
    %v316 = vunpack.c.l.b16 %v188
    %v317 = vunpack.c.l.b16 %v189
    %v318 = vunpack.c.l.b16 %v190
    %v319 = vunpack.c.l.b16 %v191
    %v320 = vunpack.c.l.b16 %v192
    %v321 = vpack.c.b16 %v258, %v257
    %v322 = vpack.c.b16 %v260, %v259
    %v323 = vpack.c.b16 %v262, %v261
    %v324 = vpack.c.b16 %v264, %v263
    %v325 = vpack.c.b16 %v266, %v265
    %v326 = vpack.c.b16 %v268, %v267
    %v327 = vpack.c.b16 %v270, %v269
    %v328 = vpack.c.b16 %v272, %v271
    %v329 = vpack.c.b16 %v274, %v273
    %v330 = vpack.c.b16 %v276, %v275
    %v331 = vpack.c.b16 %v278, %v277
    %v332 = vpack.c.b16 %v280, %v279
    %v333 = vpack.c.b16 %v282, %v281
    %v334 = vpack.c.b16 %v284, %v283
    %v335 = vpack.c.b16 %v286, %v285
    %v336 = vpack.c.b16 %v288, %v287
    %v337 = vpack.c.b16 %v290, %v289
    %v338 = vpack.c.b16 %v292, %v291
    %v339 = vpack.c.b16 %v294, %v293
    %v340 = vpack.c.b16 %v296, %v295
    %v341 = vpack.c.b16 %v298, %v297
    %v342 = vpack.c.b16 %v300, %v299
    %v343 = vpack.c.b16 %v302, %v301
    %v344 = vpack.c.b16 %v304, %v303
    %v345 = vpack.c.b16 %v306, %v305
    %v346 = vpack.c.b16 %v308, %v307
    %v347 = vpack.c.b16 %v310, %v309
    %v348 = vpack.c.b16 %v312, %v311
    %v349 = vpack.c.b16 %v314, %v313
    %v350 = vpack.c.b16 %v316, %v315
    %v351 = vpack.c.b16 %v318, %v317
    %v352 = vpack.c.b16 %v320, %v319
    %385 = vmatprep.subr.bf16.mxu0 0
    %386 = vmatpush1.bf16.msra.mxu0 %v321
    %387 = vmatprep.subr.bf16.mxu0 0
    %388 = vmatpush1.bf16.msra.mxu0 %v322
    %389 = vmatprep.subr.bf16.mxu0 0
    %390 = vmatpush1.bf16.msra.mxu0 %v323
    %391 = vmatprep.subr.bf16.mxu0 0
    %392 = vmatpush1.bf16.msra.mxu0 %v324
    %393 = vmatprep.subr.bf16.mxu0 0
    %394 = vmatpush1.bf16.msra.mxu0 %v325
    %395 = vmatprep.subr.bf16.mxu0 0
    %396 = vmatpush1.bf16.msra.mxu0 %v326
    %397 = vmatprep.subr.bf16.mxu0 0
    %398 = vmatpush1.bf16.msra.mxu0 %v327
    %399 = vmatprep.subr.bf16.mxu0 0
    %400 = vmatpush1.bf16.msra.mxu0 %v328
    %401 = vmatprep.subr.bf16.mxu0 0
    %402 = vmatpush1.bf16.msra.mxu0 %v329
    %403 = vmatprep.subr.bf16.mxu0 0
    %404 = vmatpush1.bf16.msra.mxu0 %v330
    %405 = vmatprep.subr.bf16.mxu0 0
    %406 = vmatpush1.bf16.msra.mxu0 %v331
    %407 = vmatprep.subr.bf16.mxu0 0
    %408 = vmatpush1.bf16.msra.mxu0 %v332
    %409 = vmatprep.subr.bf16.mxu0 0
    %410 = vmatpush1.bf16.msra.mxu0 %v333
    %411 = vmatprep.subr.bf16.mxu0 0
    %412 = vmatpush1.bf16.msra.mxu0 %v334
    %413 = vmatprep.subr.bf16.mxu0 0
    %414 = vmatpush1.bf16.msra.mxu0 %v335
    %415 = vmatprep.subr.bf16.mxu0 0
    %416 = vmatpush1.bf16.msra.mxu0 %v336
    %417 = vmatprep.mubr.bf16.mxu0 %v126
    %418 = vmatmul.mubr.bf16.gmra.mrb[0].mxu0 %v125
    %v419 = vpop.f32.mrb[0].mxu0
    %v420 = vadd.f32 0.0, %v419
    %v421 = vpop.f32.mrb[0].mxu0
    %v422 = vpop.f32.mrb[0].mxu0
    %v423 = vpop.f32.mrb[0].mxu0
    %424 = vdwg.mxu0
    %425 = vmatprep.subr.bf16.mxu0 0
    %426 = vmatpush1.bf16.msra.mxu0 %v337
    %427 = vmatprep.subr.bf16.mxu0 0
    %428 = vmatpush1.bf16.msra.mxu0 %v338
    %429 = vmatprep.subr.bf16.mxu0 0
    %430 = vmatpush1.bf16.msra.mxu0 %v339
    %431 = vmatprep.subr.bf16.mxu0 0
    %432 = vmatpush1.bf16.msra.mxu0 %v340
    %433 = vmatprep.subr.bf16.mxu0 0
    %434 = vmatpush1.bf16.msra.mxu0 %v341
    %435 = vmatprep.subr.bf16.mxu0 0
    %436 = vmatpush1.bf16.msra.mxu0 %v342
    %437 = vmatprep.subr.bf16.mxu0 0
    %438 = vmatpush1.bf16.msra.mxu0 %v343
    %439 = vmatprep.subr.bf16.mxu0 0
    %440 = vmatpush1.bf16.msra.mxu0 %v344
    %441 = vmatprep.subr.bf16.mxu0 0
    %442 = vmatpush1.bf16.msra.mxu0 %v345
    %443 = vmatprep.subr.bf16.mxu0 0
    %444 = vmatpush1.bf16.msra.mxu0 %v346
    %445 = vmatprep.subr.bf16.mxu0 0
    %446 = vmatpush1.bf16.msra.mxu0 %v347
    %447 = vmatprep.subr.bf16.mxu0 0
    %448 = vmatpush1.bf16.msra.mxu0 %v348
    %449 = vmatprep.subr.bf16.mxu0 0
    %450 = vmatpush1.bf16.msra.mxu0 %v349
    %451 = vmatprep.subr.bf16.mxu0 0
    %452 = vmatpush1.bf16.msra.mxu0 %v350
    %453 = vmatprep.subr.bf16.mxu0 0
    %454 = vmatpush1.bf16.msra.mxu0 %v351
    %455 = vmatprep.subr.bf16.mxu0 0
    %456 = vmatpush1.bf16.msra.mxu0 %v352
    %457 = vmatprep.mubr.bf16.mxu0 %v128
    %458 = vmatmul.mubr.bf16.gmra.mrb[0].mxu0 %v127
    %v459 = vpop.f32.mrb[0].mxu0
    %v460 = vadd.f32 %v420, %v459
    %v461 = vpop.f32.mrb[0].mxu0
    %v462 = vpop.f32.mrb[0].mxu0
    %v463 = vpop.f32.mrb[0].mxu0
    %464 = vdwg.mxu0
    %v465 = vmax.f32 %v100, 0.0
    %v466 = vpack.c.bf16 %v465, %v465
    %v467 = vmax.f32 %v460, 0.0
    %v468 = vpack.c.bf16 %v467, %v467
    %v469 = vld [vmem:[%s5] sm:$0xf]
    %v470 = vld [vmem:[%s5 + $0x4] sm:$0xf]
    %v471 = vld [vmem:[%s5 + $0x8] sm:$0xf]
    %v472 = vld [vmem:[%s5 + $0xc] sm:$0xf]
    %v473 = vld [vmem:[%s6] sm:$0xf]
    %v474 = vld [vmem:[%s6 + $0x4] sm:$0xf]
    %v475 = vld [vmem:[%s6 + $0x8] sm:$0xf]
    %v476 = vld [vmem:[%s6 + $0xc] sm:$0xf]
    %v481 = vunpack.c.l.b16 %v473
    %v482 = vunpack.c.l.b16 %v474
    %v483 = vunpack.c.l.b16 %v475
    %v484 = vunpack.c.l.b16 %v476
    %v485 = vpack.c.b16 %v482, %v481
    %v486 = vpack.c.b16 %v484, %v483
    %vm489 = vcmask 261120
    %v491 = vsel %vm489, %v468, 0
    %493 = vmatprep.subr.bf16.mxu0 0
    %494 = vmatpush1.bf16.msra.mxu0 %v485
    %495 = vmatprep.subr.bf16.mxu0 0
    %496 = vmatpush1.bf16.msra.mxu0 %v486
    %497 = vmatprep.subr.bf16.mxu0 0
    %498 = vmatpush1.bf16.msra.mxu0 0
    %499 = vmatprep.subr.bf16.mxu0 0
    %500 = vmatpush1.bf16.msra.mxu0 0
    %501 = vmatprep.subr.bf16.mxu0 0
    %502 = vmatpush1.bf16.msra.mxu0 0
    %503 = vmatprep.subr.bf16.mxu0 0
    %504 = vmatpush1.bf16.msra.mxu0 0
    %505 = vmatprep.subr.bf16.mxu0 0
    %506 = vmatpush1.bf16.msra.mxu0 0
    %507 = vmatprep.subr.bf16.mxu0 0
    %508 = vmatpush1.bf16.msra.mxu0 0
    %509 = vmatprep.subr.bf16.mxu0 0
    %510 = vmatpush1.bf16.msra.mxu0 0
    %511 = vmatprep.subr.bf16.mxu0 0
    %512 = vmatpush1.bf16.msra.mxu0 0
    %513 = vmatprep.subr.bf16.mxu0 0
    %514 = vmatpush1.bf16.msra.mxu0 0
    %515 = vmatprep.subr.bf16.mxu0 0
    %516 = vmatpush1.bf16.msra.mxu0 0
    %517 = vmatprep.subr.bf16.mxu0 0
    %518 = vmatpush1.bf16.msra.mxu0 0
    %519 = vmatprep.subr.bf16.mxu0 0
    %520 = vmatpush1.bf16.msra.mxu0 0
    %521 = vmatprep.subr.bf16.mxu0 0
    %522 = vmatpush1.bf16.msra.mxu0 0
    %523 = vmatprep.subr.bf16.mxu0 0
    %524 = vmatpush1.bf16.msra.mxu0 0
    %525 = vmatprep.mubr.bf16.mxu0 0
    %526 = vmatmul.mubr.bf16.gmra.mrb[0].mxu0 %v491
    %v527 = vpop.f32.mrb[0].mxu0
    %v528 = vadd.f32 0.0, %v527
    %v529 = vpop.f32.mrb[0].mxu0
    %v530 = vpop.f32.mrb[0].mxu0
    %v531 = vpop.f32.mrb[0].mxu0
    %532 = vdwg.mxu0
    %v537 = vunpack.c.l.b16 %v469
    %v538 = vunpack.c.l.b16 %v470
    %v539 = vunpack.c.l.b16 %v471
    %v540 = vunpack.c.l.b16 %v472
    %v541 = vpack.c.b16 %v538, %v537
    %v542 = vpack.c.b16 %v540, %v539
    %v546 = vsel %vm489, %v466, 0
    %548 = vmatprep.subr.bf16.mxu0 0
    %549 = vmatpush1.bf16.msra.mxu0 %v541
    %550 = vmatprep.subr.bf16.mxu0 0
    %551 = vmatpush1.bf16.msra.mxu0 %v542
    %552 = vmatprep.subr.bf16.mxu0 0
    %553 = vmatpush1.bf16.msra.mxu0 0
    %554 = vmatprep.subr.bf16.mxu0 0
    %555 = vmatpush1.bf16.msra.mxu0 0
    %556 = vmatprep.subr.bf16.mxu0 0
    %557 = vmatpush1.bf16.msra.mxu0 0
    %558 = vmatprep.subr.bf16.mxu0 0
    %559 = vmatpush1.bf16.msra.mxu0 0
    %560 = vmatprep.subr.bf16.mxu0 0
    %561 = vmatpush1.bf16.msra.mxu0 0
    %562 = vmatprep.subr.bf16.mxu0 0
    %563 = vmatpush1.bf16.msra.mxu0 0
    %564 = vmatprep.subr.bf16.mxu0 0
    %565 = vmatpush1.bf16.msra.mxu0 0
    %566 = vmatprep.subr.bf16.mxu0 0
    %567 = vmatpush1.bf16.msra.mxu0 0
    %568 = vmatprep.subr.bf16.mxu0 0
    %569 = vmatpush1.bf16.msra.mxu0 0
    %570 = vmatprep.subr.bf16.mxu0 0
    %571 = vmatpush1.bf16.msra.mxu0 0
    %572 = vmatprep.subr.bf16.mxu0 0
    %573 = vmatpush1.bf16.msra.mxu0 0
    %574 = vmatprep.subr.bf16.mxu0 0
    %575 = vmatpush1.bf16.msra.mxu0 0
    %576 = vmatprep.subr.bf16.mxu0 0
    %577 = vmatpush1.bf16.msra.mxu0 0
    %578 = vmatprep.subr.bf16.mxu0 0
    %579 = vmatpush1.bf16.msra.mxu0 0
    %580 = vmatprep.mubr.bf16.mxu0 0
    %581 = vmatmul.mubr.bf16.gmra.mrb[0].mxu0 %v546
    %v582 = vpop.f32.mrb[0].mxu0
    %v583 = vadd.f32 %v528, %v582
    %v584 = vpop.f32.mrb[0].mxu0
    %v585 = vpop.f32.mrb[0].mxu0
    %v586 = vpop.f32.mrb[0].mxu0
    %587 = vdwg.mxu0
    %v588 = vld [vmem:[%s7] sm:$0x1]
    %v590 = vlaneseq
    %v591 = vshrl.u32 %v590, 7
    %v592 = vsub.s32 0, %v591
    %v593 = vrot.slane %v588, %v592
    %v595 = vadd.f32 %v583, %v593
    %v596 = vmax.f32 %v595, 0.0
    %v597 = vpack.c.bf16 %v596, %v596
    %v598 = vld [vmem:[%s8] sm:$0xf]
    %v599 = vld [vmem:[%s8 + $0x4] sm:$0xf]
    %v600 = vld [vmem:[%s8 + $0x8] sm:$0xf]
    %v601 = vld [vmem:[%s8 + $0xc] sm:$0xf]
    %v602 = vld [vmem:[%s8 + $0x10] sm:$0xf]
    %v603 = vld [vmem:[%s8 + $0x14] sm:$0xf]
    %v604 = vld [vmem:[%s8 + $0x18] sm:$0xf]
    %v605 = vld [vmem:[%s8 + $0x1c] sm:$0xf]
    %v606 = vld [vmem:[%s9] sm:$0x1]
    %v608 = vlaneseq
    %v609 = vshrl.u32 %v608, 7
    %v610 = vsub.s32 0, %v609
    %v611 = vrot.slane %v606, %v610
    %v621 = vunpack.c.l.b16 %v598
    %v622 = vunpack.c.l.b16 %v599
    %v623 = vunpack.c.l.b16 %v600
    %v624 = vunpack.c.l.b16 %v601
    %v625 = vunpack.c.l.b16 %v602
    %v626 = vunpack.c.l.b16 %v603
    %v627 = vunpack.c.l.b16 %v604
    %v628 = vunpack.c.l.b16 %v605
    %v629 = vpack.c.b16 %v622, %v621
    %v630 = vpack.c.b16 %v624, %v623
    %v631 = vpack.c.b16 %v626, %v625
    %v632 = vpack.c.b16 %v628, %v627
    %vm637 = vcmask 523264
    %v639 = vsel %vm637, %v597, 0
    %641 = vmatprep.subr.bf16.mxu0 0
    %642 = vmatpush1.bf16.msra.mxu0 %v629
    %643 = vmatprep.subr.bf16.mxu0 0
    %644 = vmatpush1.bf16.msra.mxu0 %v630
    %645 = vmatprep.subr.bf16.mxu0 0
    %646 = vmatpush1.bf16.msra.mxu0 %v631
    %647 = vmatprep.subr.bf16.mxu0 0
    %648 = vmatpush1.bf16.msra.mxu0 %v632
    %649 = vmatprep.subr.bf16.mxu0 0
    %650 = vmatpush1.bf16.msra.mxu0 0
    %651 = vmatprep.subr.bf16.mxu0 0
    %652 = vmatpush1.bf16.msra.mxu0 0
    %653 = vmatprep.subr.bf16.mxu0 0
    %654 = vmatpush1.bf16.msra.mxu0 0
    %655 = vmatprep.subr.bf16.mxu0 0
    %656 = vmatpush1.bf16.msra.mxu0 0
    %657 = vmatprep.subr.bf16.mxu0 0
    %658 = vmatpush1.bf16.msra.mxu0 0
    %659 = vmatprep.subr.bf16.mxu0 0
    %660 = vmatpush1.bf16.msra.mxu0 0
    %661 = vmatprep.subr.bf16.mxu0 0
    %662 = vmatpush1.bf16.msra.mxu0 0
    %663 = vmatprep.subr.bf16.mxu0 0
    %664 = vmatpush1.bf16.msra.mxu0 0
    %665 = vmatprep.subr.bf16.mxu0 0
    %666 = vmatpush1.bf16.msra.mxu0 0
    %667 = vmatprep.subr.bf16.mxu0 0
    %668 = vmatpush1.bf16.msra.mxu0 0
    %669 = vmatprep.subr.bf16.mxu0 0
    %670 = vmatpush1.bf16.msra.mxu0 0
    %671 = vmatprep.subr.bf16.mxu0 0
    %672 = vmatpush1.bf16.msra.mxu0 0
    %673 = vmatprep.mubr.bf16.mxu0 0
    %674 = vmatmul.mubr.bf16.gmra.mrb[0].mxu0 %v639
    %v675 = vpop.f32.mrb[0].mxu0
    %v676 = vadd.f32 %v611, %v675
    %v677 = vpop.f32.mrb[0].mxu0
    %v678 = vpop.f32.mrb[0].mxu0
    %v679 = vpop.f32.mrb[0].mxu0
    %680 = vdwg.mxu0
    %v681 = vmax.f32 %v676, 0.0
    %v682 = vpack.c.bf16 %v681, %v681
    %v683 = vld [vmem:[%s10] sm:$0xf]
    %v684 = vld [vmem:[%s10 + $0x4] sm:$0xf]
    %v685 = vld [vmem:[%s10 + $0x8] sm:$0xf]
    %v686 = vld [vmem:[%s10 + $0xc] sm:$0xf]
    %v687 = vld [vmem:[%s10 + $0x10] sm:$0xf]
    %v688 = vld [vmem:[%s10 + $0x14] sm:$0xf]
    %v689 = vld [vmem:[%s10 + $0x18] sm:$0xf]
    %v690 = vld [vmem:[%s10 + $0x1c] sm:$0xf]
    %v691 = vld [vmem:[%s11] sm:$0x1]
    %v693 = vlaneseq
    %v694 = vshrl.u32 %v693, 7
    %v695 = vsub.s32 0, %v694
    %v696 = vrot.slane %v691, %v695
    %v706 = vunpack.c.l.b16 %v683
    %v707 = vunpack.c.l.b16 %v684
    %v708 = vunpack.c.l.b16 %v685
    %v709 = vunpack.c.l.b16 %v686
    %v710 = vunpack.c.l.b16 %v687
    %v711 = vunpack.c.l.b16 %v688
    %v712 = vunpack.c.l.b16 %v689
    %v713 = vunpack.c.l.b16 %v690
    %v714 = vpack.c.b16 %v707, %v706
    %v715 = vpack.c.b16 %v709, %v708
    %v716 = vpack.c.b16 %v711, %v710
    %v717 = vpack.c.b16 %v713, %v712
    %v723 = vsel %vm637, %v682, 0
    %725 = vmatprep.subr.bf16.mxu0 0
    %726 = vmatpush1.bf16.msra.mxu0 %v714
    %727 = vmatprep.subr.bf16.mxu0 0
    %728 = vmatpush1.bf16.msra.mxu0 %v715
    %729 = vmatprep.subr.bf16.mxu0 0
    %730 = vmatpush1.bf16.msra.mxu0 %v716
    %731 = vmatprep.subr.bf16.mxu0 0
    %732 = vmatpush1.bf16.msra.mxu0 %v717
    %733 = vmatprep.subr.bf16.mxu0 0
    %734 = vmatpush1.bf16.msra.mxu0 0
    %735 = vmatprep.subr.bf16.mxu0 0
    %736 = vmatpush1.bf16.msra.mxu0 0
    %737 = vmatprep.subr.bf16.mxu0 0
    %738 = vmatpush1.bf16.msra.mxu0 0
    %739 = vmatprep.subr.bf16.mxu0 0
    %740 = vmatpush1.bf16.msra.mxu0 0
    %741 = vmatprep.subr.bf16.mxu0 0
    %742 = vmatpush1.bf16.msra.mxu0 0
    %743 = vmatprep.subr.bf16.mxu0 0
    %744 = vmatpush1.bf16.msra.mxu0 0
    %745 = vmatprep.subr.bf16.mxu0 0
    %746 = vmatpush1.bf16.msra.mxu0 0
    %747 = vmatprep.subr.bf16.mxu0 0
    %748 = vmatpush1.bf16.msra.mxu0 0
    %749 = vmatprep.subr.bf16.mxu0 0
    %750 = vmatpush1.bf16.msra.mxu0 0
    %751 = vmatprep.subr.bf16.mxu0 0
    %752 = vmatpush1.bf16.msra.mxu0 0
    %753 = vmatprep.subr.bf16.mxu0 0
    %754 = vmatpush1.bf16.msra.mxu0 0
    %755 = vmatprep.subr.bf16.mxu0 0
    %756 = vmatpush1.bf16.msra.mxu0 0
    %757 = vmatprep.mubr.bf16.mxu0 0
    %758 = vmatmul.mubr.bf16.gmra.mrb[0].mxu0 %v723
    %v759 = vpop.f32.mrb[0].mxu0
    %v760 = vadd.f32 %v696, %v759
    %v761 = vpop.f32.mrb[0].mxu0
    %v762 = vpop.f32.mrb[0].mxu0
    %v763 = vpop.f32.mrb[0].mxu0
    %764 = vdwg.mxu0
    %765 = vmax.xlane.f32.xlu0 %v760
    %v766 = vpop.xlane.xlu0 %765
    %v767 = vsub.f32 %v760, %v766
    %v768 = vmul.f32 %v767, 1.442695
    %v769 = vpow.pop %v768
    %770 = vadd.xlane.f32.xlu0 %v769
    %v771 = vpop.xlane.xlu0 %770
    %v772 = vrcp.pop %v771
    %v773 = vmul.f32 %v769, %v772
    %774 = vst [vmem:[#allocation2] sm:$0xff] %v773
    // Predicated region
    $region50: #{tpu_custom_call.1} parent=1 // pred_check
      _
    $region51: #{tpu_custom_call.1} parent=1 // pred_check_branch
      %776 = sbr.rel (0) target = $region53
    $region52: #{tpu_custom_call.1} parent=1 // pred_region
      %s778 = ssub.s32 128, 128
      %779 = vsyncadd [#allocation3], %s778
      %s781 = sshll.u32 [#allocation2], 4
      %s782 = int_to_ptr.vmem [resolvable:$true] %s781
      %784 = dma.vmem_to_hbm [thread:$0]  %s782, 128, %s12, [#allocation3]
    $region53: #{tpu_custom_call.1} parent=1 // pred_fallthru
      _
    // Predicated region
    $region54: #{tpu_custom_call.1} parent=1 // pred_check
      _
    $region55: #{tpu_custom_call.1} parent=1 // pred_check_branch
      %786 = sbr.rel (0) target = $region57
    $region56: #{tpu_custom_call.1} parent=1 // pred_region
      %787 = dma.done [#allocation3], 128
    $region57: #{tpu_custom_call.1} parent=1 // pred_fallthru
      _
    %788 = vsyncpa [#allocation3], 1

</llo_original>
